<compile_context>
chip_gen: v7x
topology: tpu7x:2x2x1
jax: 0.10.0
libtpu: 0.0.40
codegen_flags: <defaults>
</compile_context>

<pallas_src>
import functools

import jax
import jax.numpy as jnp
import numpy as np
from jax import lax
from jax.experimental import pallas as pl
from jax.experimental.pallas import tpu as pltpu

EPS = 1e-5


def _fold_bn(gamma, beta, mean, var):
    scale = gamma / jnp.sqrt(var + EPS)
    shift = beta - mean * scale
    return scale, shift


def esblock_main_kernel(x_ref, wp_ref, taps_ref, wc_ref, b_ref, o_ref, pad_ref,
                        *, W, PAD):
    """Main branch (GhostBlock pw + dw3x3 -> pointwise_conv), NB images / step.

    Kernel-view shapes:
      x_ref    (NB, C1, HW)          bf16  input half (channels on sublanes)
      wp_ref   (M1, C1)              bf16  primary 1x1 weight, BN folded
      taps_ref (9, M1, HW)           f32   depthwise taps, BN scale AND
                                           column-border masks pre-folded
      wc_ref   (C1, 2*M1)            bf16  projection 1x1 weight, BN folded
      b_ref    (2*M1 + C1, 1)        f32   packed biases [bp | bd | bc]
      o_ref    (NB, C1, HW)          bf16  output half
      pad_ref  (M1, PAD + HW + PAD)  f32   zero-haloed depthwise scratch,
                                           PAD is a multiple of 128 (aligned)
    """
    NB, C1, HW = x_ref.shape
    M1 = wp_ref.shape[0]

    # Zero only the halo borders; interior is fully overwritten for every
    # image.  Done every grid step so "parallel" sharding needs no cross-step
    # init.  Both stores are lane-aligned (PAD, PAD+HW are multiples of 128).
    zero_halo = jnp.zeros((M1, PAD), jnp.float32)
    pad_ref[:, pl.ds(0, PAD)] = zero_halo
    pad_ref[:, pl.ds(PAD + HW, PAD)] = zero_halo

    # Small weights/biases hoisted once per grid step (few vregs).
    wp = wp_ref[...]
    wc = wc_ref[...]
    b_all = b_ref[...]
    bp = b_all[0:M1]                       # (M1, 1)
    bd = b_all[M1:2 * M1]                  # (M1, 1)
    bc = b_all[2 * M1:]                    # (C1, 1)

    def body(b, carry):
        # --- GhostBlock primary 1x1 conv (BN folded) + bias + ReLU ---
        y = jnp.dot(wp, x_ref[b], preferred_element_type=jnp.float32)   # (M1, HW)
        y = jnp.maximum(y + bp, 0.0)

        # --- GhostBlock cheap 3x3 depthwise conv (BN folded) + bias + ReLU ---
        # Shift by dy*W + dx along the flattened spatial (lane) axis; the zero
        # halo handles row overflow, column wrap is killed by the 0/1 masks
        # already folded into taps_ref on the host.  Taps are read from VMEM
        # (planned vld) instead of being held live across the image loop.
        pad_ref[:, pl.ds(PAD, HW)] = y     # lane-aligned interior store
        z = None
        for k in range(9):                 # static 9-tap unroll
            dy, dx = k // 3 - 1, k % 3 - 1
            term = pad_ref[:, pl.ds(PAD + dy * W + dx, HW)] * taps_ref[k]
            z = term if z is None else z + term
        z = jnp.maximum(z + bd, 0.0)

        # --- pointwise_conv on concat([y, z]) (BN folded) + bias + ReLU ---
        # Single fused K=2*M1 MXU dot (sublane concat of tile-aligned halves),
        # one bf16 cast for both halves.
        g = jnp.concatenate([y, z], axis=0).astype(jnp.bfloat16)        # (2*M1, HW)
        o = jnp.dot(wc, g, preferred_element_type=jnp.float32)          # (C1, HW)
        o = jnp.maximum(o + bc, 0.0)
        o_ref[b] = o.astype(o_ref.dtype)   # lane-dense bf16 store
        return carry

    # TODO(synk): on v5e the 1x1 weights could be held stationary across NB
    #   images via pltpu.matmul_push_rhs/acc_lhs/pop; generic path kept here.
    lax.fori_loop(0, NB, body, None, unroll=True)


def _pick_block_batch(n, c1, m1, hw, pad_width, vmem_cap):
    """Images per grid step, VMEM-aware (includes taps + halo scratch)."""
    budget = max(vmem_cap // 12, 1 << 20)              # ~10 MiB v5e/v6e, ~5 MiB v7x
    fixed = (9 * m1 * hw * 4) * 2                      # masked taps (double-buffered)
    fixed += m1 * pad_width * 4                        # halo scratch
    fixed += (m1 * c1 * 2 + c1 * 2 * m1 * 2 + (2 * m1 + c1) * 4) * 2
    per_img = c1 * hw * (2 + 2) * 2                    # bf16 in + bf16 out, x2 buffers
    nb = (budget - fixed) // max(per_img, 1)
    max_nb = max(1, n // 2)                            # keep grid length >= 2 (v7x cores)
    nb = int(max(1, min(n, max_nb, nb)))
    while n % nb:
        nb -= 1
    return nb


def init_params(key, in_channels, mid_channels):
    C1 = in_channels // 2
    M1 = mid_channels // 2
    M = mid_channels
    ks = jax.random.split(key, 6)

    def bn(k, c):
        k1, k2, k3, k4 = jax.random.split(k, 4)
        return dict(gamma=1.0 + 0.1 * jax.random.normal(k1, (c,), jnp.float32),
                    beta=0.1 * jax.random.normal(k2, (c,), jnp.float32),
                    mean=0.1 * jax.random.normal(k3, (c,), jnp.float32),
                    var=0.5 + 0.1 * jnp.abs(jax.random.normal(k4, (c,), jnp.float32)))

    return dict(
        wp=0.1 * jax.random.normal(ks[0], (M1, C1), jnp.float32),    # primary 1x1, (out, in)
        wd=0.1 * jax.random.normal(ks[1], (M1, 3, 3), jnp.float32),  # depthwise 3x3
        wc=0.1 * jax.random.normal(ks[2], (C1, M), jnp.float32),     # pointwise 1x1, (out, in)
        bn_p=bn(ks[3], M1), bn_d=bn(ks[4], M1), bn_c=bn(ks[5], C1),
    )


def esblock_s1_pallas(x_nchw, p):
    N, C, H, W = x_nchw.shape
    assert C % 2 == 0
    C1 = C // 2
    M1 = p['wp'].shape[0]
    HW = H * W
    # Halo width: >= W+1 and a multiple of 128 lanes so interior stores align.
    PAD = ((W + 1 + 127) // 128) * 128
    # Note: HW % 128 == 0 keeps every store unmasked (perf only, not correctness).

    # Split: x2 (identity half) never leaves NCHW; x1 goes channels-major with
    # flattened spatial (free reshape), cast to bf16 for the MXU.
    x1 = x_nchw[:, :C1].reshape(N, C1, HW).astype(jnp.bfloat16)
    x2 = x_nchw[:, C1:]

    # Fold BN scales into the conv weights; only biases go to the kernel.
    sp, bp = _fold_bn(**p['bn_p'])
    sd, bd = _fold_bn(**p['bn_d'])
    sc, bc = _fold_bn(**p['bn_c'])

    wp_k = (p['wp'] * sp[:, None]).astype(jnp.bfloat16)                # (M1, C1)
    wc_k = (p['wc'] * sc[:, None]).astype(jnp.bfloat16)                # (C1, 2*M1)
    bias_k = jnp.concatenate([bp, bd, bc]).reshape(2 * M1 + C1, 1)     # packed biases

    # Masked depthwise taps, host-precomputed as an outer product:
    #   taps[k] = (BN-folded tap k) x (column validity mask for dx = k%3 - 1).
    wd_f = (p['wd'] * sd[:, None, None]).reshape(M1, 9)                # (M1, 9)
    wpos = jnp.arange(HW, dtype=jnp.int32) % W
    col_masks = jnp.stack([(wpos > 0).astype(jnp.float32),             # dx = -1
                           jnp.ones((HW,), jnp.float32),               # dx =  0
                           (wpos < W - 1).astype(jnp.float32)])        # dx = +1
    taps_k = wd_f.T[:, :, None] * col_masks[jnp.arange(9) % 3][:, None, :]  # (9, M1, HW)

    # Generation-aware VMEM budget / limit.
    try:
        vmem_cap = int(pltpu.get_tpu_info().vmem_capacity_bytes)
    except Exception:
        vmem_cap = 64 * 1024 * 1024
    vmem_limit = min(3 * vmem_cap // 4, 96 * 1024 * 1024)   # 96 MiB v5e/v6e, 48 MiB v7x

    NB = _pick_block_batch(N, C1, M1, HW, 2 * PAD + HW, vmem_cap)
    grid = (N // NB,)

    flops = 2 * N * HW * M1 * (3 * C1 + 9)
    bytes_acc = (N * C1 * HW * (2 + 2)                       # bf16 in + bf16 out
                 + taps_k.size * 4 + wp_k.size * 2 + wc_k.size * 2 + bias_k.size * 4)

    kernel = functools.partial(esblock_main_kernel, W=W, PAD=PAD)
    const = lambda shape: pl.BlockSpec(shape, lambda b: tuple(0 for _ in shape))

    y1 = pl.pallas_call(
        kernel,
        out_shape=jax.ShapeDtypeStruct((N, C1, HW), jnp.bfloat16),
        grid=grid,
        in_specs=[
            pl.BlockSpec((NB, C1, HW), lambda b: (b, 0, 0)),
            const((M1, C1)),
            const((9, M1, HW)),
            const((C1, 2 * M1)),
            const((2 * M1 + C1, 1)),
        ],
        out_specs=pl.BlockSpec((NB, C1, HW), lambda b: (b, 0, 0)),
        scratch_shapes=[pltpu.VMEM((M1, PAD + HW + PAD), jnp.float32)],
        compiler_params=pltpu.CompilerParams(
            dimension_semantics=("parallel",),
            vmem_limit_bytes=vmem_limit),
        cost_estimate=pl.CostEstimate(flops=flops, transcendentals=0,
                                      bytes_accessed=bytes_acc),
    )(x1, wp_k, taps_k, wc_k, bias_k)

    # concat([y1, x2], dim=C) + ChannelShuffle(groups=2) == channel interleave,
    # done entirely in NCHW so x2 never goes through a layout pass and stays exact.
    y1_nchw = y1.reshape(N, C1, H, W).astype(jnp.float32)
    return jnp.stack([y1_nchw, x2], axis=2).reshape(N, C, H, W)


def esblock_s1_reference(x, p):
    """Pure-JAX (lax.conv) reference matching the PyTorch forward semantics (NCHW)."""
    N, C, H, W = x.shape
    C1 = C // 2
    M1 = p['wp'].shape[0]
    x1, x2 = x[:, :C1], x[:, C1:]
    dn = ('NCHW', 'OIHW', 'NCHW')

    def bn_apply(v, bn):
        s, b = _fold_bn(**bn)
        return v * s[None, :, None, None] + b[None, :, None, None]

    y = lax.conv_general_dilated(x1, p['wp'][:, :, None, None], (1, 1), 'VALID',
                                 dimension_numbers=dn)
    y = jax.nn.relu(bn_apply(y, p['bn_p']))
    z = lax.conv_general_dilated(y, p['wd'][:, None, :, :], (1, 1), ((1, 1), (1, 1)),
                                 dimension_numbers=dn, feature_group_count=M1)
    z = jax.nn.relu(bn_apply(z, p['bn_d']))
    g = jnp.concatenate([y, z], axis=1)
    o = lax.conv_general_dilated(g, p['wc'][:, :, None, None], (1, 1), 'VALID',
                                 dimension_numbers=dn)
    o = jax.nn.relu(bn_apply(o, p['bn_c']))
    xc = jnp.concatenate([o, x2], axis=1)
    return xc.reshape(N, 2, C // 2, H, W).transpose(0, 2, 1, 3, 4).reshape(N, C, H, W)


if __name__ == "__main__":
    key = jax.random.PRNGKey(0)
    k_x, k_p = jax.random.split(key)

    N, C, H, W = 2, 16, 16, 16          # in_channels=16 -> C1=8, HW=256 (lane dense)
    mid_channels = 16                    # M1=8 (sublane-tile aligned halves)
    x = jax.random.normal(k_x, (N, C, H, W), jnp.float32)
    params = init_params(k_p, C, mid_channels)

    out = jax.block_until_ready(esblock_s1_pallas(x, params))
    ref = jax.block_until_ready(esblock_s1_reference(x, params))

    assert out.shape == (N, C, H, W), out.shape
    err = float(np.max(np.abs(np.asarray(out) - np.asarray(ref))))
    # bf16 matmul operands + bf16 kernel output (f32 accumulation) -> loose tolerance.
    assert np.allclose(np.asarray(out), np.asarray(ref), rtol=2e-2, atol=2e-2), err
    print("KERNEL_OK")
</pallas_src>

<mosaic_0001>
module attributes {stable_mosaic.version = 11 : i64} {
  func.func @esblock_main_kernel(%arg0: i32, %arg1: memref<1x8x256xbf16, #tpu.memory_space<vmem>>, %arg2: memref<8x8xbf16, #tpu.memory_space<vmem>>, %arg3: memref<9x8x256xf32, #tpu.memory_space<vmem>>, %arg4: memref<8x16xbf16, #tpu.memory_space<vmem>>, %arg5: memref<24x1xf32, #tpu.memory_space<vmem>>, %arg6: memref<1x8x256xbf16, #tpu.memory_space<vmem>>, %arg7: memref<8x512xf32, #tpu.memory_space<vmem>>) attributes {dimension_semantics = [#tpu.dimension_semantics<parallel>], iteration_bounds = array<i64: 2>, scalar_prefetch = 0 : i64, scratch_operands = 1 : i64, tpu.core_type = #tpu.core_type<tc>, window_params = [{transform_indices = @transform_0, window_bounds = array<i64: 1, 8, 256>}, {pipeline_mode = #tpu.pipeline_mode<synchronous>, transform_indices = @transform_1, window_bounds = array<i64: 8, 8>}, {pipeline_mode = #tpu.pipeline_mode<synchronous>, transform_indices = @transform_2, window_bounds = array<i64: 9, 8, 256>}, {pipeline_mode = #tpu.pipeline_mode<synchronous>, transform_indices = @transform_3, window_bounds = array<i64: 8, 16>}, {pipeline_mode = #tpu.pipeline_mode<synchronous>, transform_indices = @transform_4, window_bounds = array<i64: 24, 1>}, {transform_indices = @transform_5, window_bounds = array<i64: 1, 8, 256>}]} {
    %cst = arith.constant 0.000000e+00 : f32
    %0 = vector.broadcast %cst : f32 to vector<8x128xf32>
    %c0 = arith.constant 0 : index
    %c0_0 = arith.constant 0 : index
    %1 = vector.load %arg7[%c0, %c0_0] : memref<8x512xf32, #tpu.memory_space<vmem>>, vector<8x128xf32>
    tpu.vector_store %arg7[%c0, %c0_0], %0 {strides = array<i32>} : memref<8x512xf32, #tpu.memory_space<vmem>>, vector<8x128xf32>,
    %c0_1 = arith.constant 0 : index
    %c384 = arith.constant 384 : index
    %2 = vector.load %arg7[%c0_1, %c384] : memref<8x512xf32, #tpu.memory_space<vmem>>, vector<8x128xf32>
    tpu.vector_store %arg7[%c0_1, %c384], %0 {strides = array<i32>} : memref<8x512xf32, #tpu.memory_space<vmem>>, vector<8x128xf32>,
    %c0_2 = arith.constant 0 : index
    %c0_3 = arith.constant 0 : index
    %3 = vector.load %arg2[%c0_2, %c0_3] : memref<8x8xbf16, #tpu.memory_space<vmem>>, vector<8x8xbf16>
    %c0_4 = arith.constant 0 : index
    %c0_5 = arith.constant 0 : index
    %4 = vector.load %arg4[%c0_4, %c0_5] : memref<8x16xbf16, #tpu.memory_space<vmem>>, vector<8x16xbf16>
    %c0_6 = arith.constant 0 : index
    %c0_7 = arith.constant 0 : index
    %5 = vector.load %arg5[%c0_6, %c0_7] : memref<24x1xf32, #tpu.memory_space<vmem>>, vector<24x1xf32>
    %6 = vector.extract_strided_slice %5 {offsets = [0, 0], sizes = [8, 1], strides = [1, 1]} : vector<24x1xf32> to vector<8x1xf32>
    %7 = vector.extract_strided_slice %5 {offsets = [8, 0], sizes = [8, 1], strides = [1, 1]} : vector<24x1xf32> to vector<8x1xf32>
    %8 = vector.extract_strided_slice %5 {offsets = [16, 0], sizes = [8, 1], strides = [1, 1]} : vector<24x1xf32> to vector<8x1xf32>
    %c0_i32 = arith.constant 0 : i32
    %9 = arith.index_cast %c0_i32 : i32 to index
    %c0_8 = arith.constant 0 : index
    %c0_9 = arith.constant 0 : index
    %10 = vector.load %arg1[%9, %c0_8, %c0_9] : memref<1x8x256xbf16, #tpu.memory_space<vmem>>, vector<1x8x256xbf16>
    %11 = vector.shape_cast %10 : vector<1x8x256xbf16> to vector<8x256xbf16>
    %cst_10 = arith.constant dense<0.000000e+00> : vector<8x256xf32>
    %12 = tpu.matmul %3, %11, %cst_10 {dimension_numbers = #tpu.dot_dimension_numbers<[1], [0], [0], [1], [0, 0, 1, 1], [], []>} : vector<8x8xbf16>, vector<8x256xbf16>, vector<8x256xf32> -> vector<8x256xf32>
    %13 = vector.broadcast %6 : vector<8x1xf32> to vector<8x256xf32>
    %14 = arith.addf %12, %13 : vector<8x256xf32>
    %cst_11 = arith.constant 0.000000e+00 : f32
    %15 = vector.broadcast %cst_11 : f32 to vector<8x256xf32>
    %16 = arith.maximumf %14, %15 : vector<8x256xf32>
    %c0_12 = arith.constant 0 : index
    %c128 = arith.constant 128 : index
    %17 = vector.load %arg7[%c0_12, %c128] : memref<8x512xf32, #tpu.memory_space<vmem>>, vector<8x256xf32>
    tpu.vector_store %arg7[%c0_12, %c128], %16 {strides = array<i32>} : memref<8x512xf32, #tpu.memory_space<vmem>>, vector<8x256xf32>,
    %c0_13 = arith.constant 0 : index
    %c111 = arith.constant 111 : index
    %18 = vector.load %arg7[%c0_13, %c111] : memref<8x512xf32, #tpu.memory_space<vmem>>, vector<8x256xf32>
    %c0_14 = arith.constant 0 : index
    %c0_15 = arith.constant 0 : index
    %c0_16 = arith.constant 0 : index
    %19 = vector.load %arg3[%c0_14, %c0_15, %c0_16] : memref<9x8x256xf32, #tpu.memory_space<vmem>>, vector<1x8x256xf32>
    %20 = vector.shape_cast %19 : vector<1x8x256xf32> to vector<8x256xf32>
    %21 = arith.mulf %18, %20 : vector<8x256xf32>
    %c0_17 = arith.constant 0 : index
    %c112 = arith.constant 112 : index
    %22 = vector.load %arg7[%c0_17, %c112] : memref<8x512xf32, #tpu.memory_space<vmem>>, vector<8x256xf32>
    %c1 = arith.constant 1 : index
    %c0_18 = arith.constant 0 : index
    %c0_19 = arith.constant 0 : index
    %23 = vector.load %arg3[%c1, %c0_18, %c0_19] : memref<9x8x256xf32, #tpu.memory_space<vmem>>, vector<1x8x256xf32>
    %24 = vector.shape_cast %23 : vector<1x8x256xf32> to vector<8x256xf32>
    %25 = arith.mulf %22, %24 : vector<8x256xf32>
    %26 = arith.addf %21, %25 : vector<8x256xf32>
    %c0_20 = arith.constant 0 : index
    %c113 = arith.constant 113 : index
    %27 = vector.load %arg7[%c0_20, %c113] : memref<8x512xf32, #tpu.memory_space<vmem>>, vector<8x256xf32>
    %c2 = arith.constant 2 : index
    %c0_21 = arith.constant 0 : index
    %c0_22 = arith.constant 0 : index
    %28 = vector.load %arg3[%c2, %c0_21, %c0_22] : memref<9x8x256xf32, #tpu.memory_space<vmem>>, vector<1x8x256xf32>
    %29 = vector.shape_cast %28 : vector<1x8x256xf32> to vector<8x256xf32>
    %30 = arith.mulf %27, %29 : vector<8x256xf32>
    %31 = arith.addf %26, %30 : vector<8x256xf32>
    %c0_23 = arith.constant 0 : index
    %c127 = arith.constant 127 : index
    %32 = vector.load %arg7[%c0_23, %c127] : memref<8x512xf32, #tpu.memory_space<vmem>>, vector<8x256xf32>
    %c3 = arith.constant 3 : index
    %c0_24 = arith.constant 0 : index
    %c0_25 = arith.constant 0 : index
    %33 = vector.load %arg3[%c3, %c0_24, %c0_25] : memref<9x8x256xf32, #tpu.memory_space<vmem>>, vector<1x8x256xf32>
    %34 = vector.shape_cast %33 : vector<1x8x256xf32> to vector<8x256xf32>
    %35 = arith.mulf %32, %34 : vector<8x256xf32>
    %36 = arith.addf %31, %35 : vector<8x256xf32>
    %c0_26 = arith.constant 0 : index
    %c128_27 = arith.constant 128 : index
    %37 = vector.load %arg7[%c0_26, %c128_27] : memref<8x512xf32, #tpu.memory_space<vmem>>, vector<8x256xf32>
    %c4 = arith.constant 4 : index
    %c0_28 = arith.constant 0 : index
    %c0_29 = arith.constant 0 : index
    %38 = vector.load %arg3[%c4, %c0_28, %c0_29] : memref<9x8x256xf32, #tpu.memory_space<vmem>>, vector<1x8x256xf32>
    %39 = vector.shape_cast %38 : vector<1x8x256xf32> to vector<8x256xf32>
    %40 = arith.mulf %37, %39 : vector<8x256xf32>
    %41 = arith.addf %36, %40 : vector<8x256xf32>
    %c0_30 = arith.constant 0 : index
    %c129 = arith.constant 129 : index
    %42 = vector.load %arg7[%c0_30, %c129] : memref<8x512xf32, #tpu.memory_space<vmem>>, vector<8x256xf32>
    %c5 = arith.constant 5 : index
    %c0_31 = arith.constant 0 : index
    %c0_32 = arith.constant 0 : index
    %43 = vector.load %arg3[%c5, %c0_31, %c0_32] : memref<9x8x256xf32, #tpu.memory_space<vmem>>, vector<1x8x256xf32>
    %44 = vector.shape_cast %43 : vector<1x8x256xf32> to vector<8x256xf32>
    %45 = arith.mulf %42, %44 : vector<8x256xf32>
    %46 = arith.addf %41, %45 : vector<8x256xf32>
    %c0_33 = arith.constant 0 : index
    %c143 = arith.constant 143 : index
    %47 = vector.load %arg7[%c0_33, %c143] : memref<8x512xf32, #tpu.memory_space<vmem>>, vector<8x256xf32>
    %c6 = arith.constant 6 : index
    %c0_34 = arith.constant 0 : index
    %c0_35 = arith.constant 0 : index
    %48 = vector.load %arg3[%c6, %c0_34, %c0_35] : memref<9x8x256xf32, #tpu.memory_space<vmem>>, vector<1x8x256xf32>
    %49 = vector.shape_cast %48 : vector<1x8x256xf32> to vector<8x256xf32>
    %50 = arith.mulf %47, %49 : vector<8x256xf32>
    %51 = arith.addf %46, %50 : vector<8x256xf32>
    %c0_36 = arith.constant 0 : index
    %c144 = arith.constant 144 : index
    %52 = vector.load %arg7[%c0_36, %c144] : memref<8x512xf32, #tpu.memory_space<vmem>>, vector<8x256xf32>
    %c7 = arith.constant 7 : index
    %c0_37 = arith.constant 0 : index
    %c0_38 = arith.constant 0 : index
    %53 = vector.load %arg3[%c7, %c0_37, %c0_38] : memref<9x8x256xf32, #tpu.memory_space<vmem>>, vector<1x8x256xf32>
    %54 = vector.shape_cast %53 : vector<1x8x256xf32> to vector<8x256xf32>
    %55 = arith.mulf %52, %54 : vector<8x256xf32>
    %56 = arith.addf %51, %55 : vector<8x256xf32>
    %c0_39 = arith.constant 0 : index
    %c145 = arith.constant 145 : index
    %57 = vector.load %arg7[%c0_39, %c145] : memref<8x512xf32, #tpu.memory_space<vmem>>, vector<8x256xf32>
    %c8 = arith.constant 8 : index
    %c0_40 = arith.constant 0 : index
    %c0_41 = arith.constant 0 : index
    %58 = vector.load %arg3[%c8, %c0_40, %c0_41] : memref<9x8x256xf32, #tpu.memory_space<vmem>>, vector<1x8x256xf32>
    %59 = vector.shape_cast %58 : vector<1x8x256xf32> to vector<8x256xf32>
    %60 = arith.mulf %57, %59 : vector<8x256xf32>
    %61 = arith.addf %56, %60 : vector<8x256xf32>
    %62 = vector.broadcast %7 : vector<8x1xf32> to vector<8x256xf32>
    %63 = arith.addf %61, %62 : vector<8x256xf32>
    %cst_42 = arith.constant 0.000000e+00 : f32
    %64 = vector.broadcast %cst_42 : f32 to vector<8x256xf32>
    %65 = arith.maximumf %63, %64 : vector<8x256xf32>
    %66 = tpu.concatenate %16, %65 in 0 : vector<8x256xf32>, vector<8x256xf32> -> vector<16x256xf32>
    %67 = arith.truncf %66 : vector<16x256xf32> to vector<16x256xbf16>
    %cst_43 = arith.constant dense<0.000000e+00> : vector<8x256xf32>
    %68 = tpu.matmul %4, %67, %cst_43 {dimension_numbers = #tpu.dot_dimension_numbers<[1], [0], [0], [1], [0, 0, 1, 1], [], []>} : vector<8x16xbf16>, vector<16x256xbf16>, vector<8x256xf32> -> vector<8x256xf32>
    %69 = vector.broadcast %8 : vector<8x1xf32> to vector<8x256xf32>
    %70 = arith.addf %68, %69 : vector<8x256xf32>
    %cst_44 = arith.constant 0.000000e+00 : f32
    %71 = vector.broadcast %cst_44 : f32 to vector<8x256xf32>
    %72 = arith.maximumf %70, %71 : vector<8x256xf32>
    %73 = arith.truncf %72 : vector<8x256xf32> to vector<8x256xbf16>
    %74 = arith.index_cast %c0_i32 : i32 to index
    %c0_45 = arith.constant 0 : index
    %c0_46 = arith.constant 0 : index
    %75 = vector.load %arg6[%74, %c0_45, %c0_46] : memref<1x8x256xbf16, #tpu.memory_space<vmem>>, vector<1x8x256xbf16>
    %76 = vector.shape_cast %75 : vector<1x8x256xbf16> to vector<8x256xbf16>
    %77 = vector.shape_cast %73 : vector<8x256xbf16> to vector<1x8x256xbf16>
    tpu.vector_store %arg6[%74, %c0_45, %c0_46], %77 {strides = array<i32>} : memref<1x8x256xbf16, #tpu.memory_space<vmem>>, vector<1x8x256xbf16>,
    %c1_i32 = arith.constant 1 : i32
    return
  }
  func.func @transform_0(%arg0: i32) -> (i32, i32, i32) {
    %c0_i32 = arith.constant 0 : i32
    %c0_i32_0 = arith.constant 0 : i32
    %c0_i32_1 = arith.constant 0 : i32
    return %arg0, %c0_i32, %c0_i32_0 : i32, i32, i32
  }
  func.func @transform_1(%arg0: i32) -> (i32, i32) {
    %c0_i32 = arith.constant 0 : i32
    %c0_i32_0 = arith.constant 0 : i32
    %c0_i32_1 = arith.constant 0 : i32
    return %c0_i32, %c0_i32_0 : i32, i32
  }
  func.func @transform_2(%arg0: i32) -> (i32, i32, i32) {
    %c0_i32 = arith.constant 0 : i32
    %c0_i32_0 = arith.constant 0 : i32
    %c0_i32_1 = arith.constant 0 : i32
    %c0_i32_2 = arith.constant 0 : i32
    return %c0_i32, %c0_i32_0, %c0_i32_1 : i32, i32, i32
  }
  func.func @transform_3(%arg0: i32) -> (i32, i32) {
    %c0_i32 = arith.constant 0 : i32
    %c0_i32_0 = arith.constant 0 : i32
    %c0_i32_1 = arith.constant 0 : i32
    return %c0_i32, %c0_i32_0 : i32, i32
  }
  func.func @transform_4(%arg0: i32) -> (i32, i32) {
    %c0_i32 = arith.constant 0 : i32
    %c0_i32_0 = arith.constant 0 : i32
    %c0_i32_1 = arith.constant 0 : i32
    return %c0_i32, %c0_i32_0 : i32, i32
  }
  func.func @transform_5(%arg0: i32) -> (i32, i32, i32) {
    %c0_i32 = arith.constant 0 : i32
    %c0_i32_0 = arith.constant 0 : i32
    %c0_i32_1 = arith.constant 0 : i32
    return %arg0, %c0_i32, %c0_i32_0 : i32, i32, i32
  }
}

</mosaic_0001>

<llo_original>
// kernel: tpu_custom_call.1
$region0: #{tpu_custom_call.1}
  #allocation0 [shape = 'u32[]', space=smem, size = 0x4, offset = 0x4, fixed_abs, tag = 'smem constant byte address 0x4 - core index']
  #allocation1 [shape = 'u32[144,128]{1,0:T(1,128)}', space=vmem, size = 0x12000, scoped, tag = 'internal scratch']
  #allocation2 [shape = 'f32[8,512]{1,0:T(8,128)}', space=vmem, size = 0x4000, scoped, tag = 'scratch operand']
  %s0 = inlined_call_operand.vmem [shape: bf16[2,8,256], index: 0, kind: input, shape index: {}]
  %s1 = inlined_call_operand.vmem [shape: bf16[8,8], index: 1, kind: input, shape index: {}]
  %s2 = inlined_call_operand.hbm [shape: f32[9,8,256], index: 2, kind: input, shape index: {}]
  %s3 = inlined_call_operand.vmem [shape: bf16[8,16], index: 3, kind: input, shape index: {}]
  %s4 = inlined_call_operand.vmem [shape: f32[24,1], index: 4, kind: input, shape index: {}]
  %s5 = inlined_call_operand.hbm [shape: bf16[2,8,256], index: 5, kind: output, shape index: {}]
  %s6 = sld [smem:[#allocation0]]
  $region57: #{tpu_custom_call.1} parent=0
    _
  %s8 = ssub.s32 1, %s6
  %s9 = scalar_select 0, %s8, %s6
  $region1: #{tpu_custom_call.1} parent=0
    #allocation3 [shape = 'u8[73728]{0}', space=vmem, size = 0x12000, scoped, tag = 'input window, operand 2, single buffered']
    #allocation4 [shape = 's32[2]{0}', space=sflag, size = 0x8, scoped, tag = 'scoped memory for tpu_custom_call.1']
    #allocation5 [shape = 's32[2]{0}', space=sflag, size = 0x8, scoped, tag = 'scoped memory for tpu_custom_call.1']
    #allocation6 [shape = 'u8[8192]{0}', space=vmem, size = 0x2000, scoped, tag = 'output window, operand 0']
    %10 = vsyncpa [#allocation4], 0
    %11 = vsyncpa [#allocation5], 0
    %s12 = scalar_lea.sflag [#allocation5], 1
    %13 = vsyncpa %s12, 0
    loop: start=0, step=1, limit=4
    $region2: #{tpu_custom_call.1} parent=1 // loop_pre_header
      _
    $region3: #{tpu_custom_call.1} parent=1 // loop_header
      %s15 = sphi 0, %s19
      %p16 = scmp.ge.s32.totalorder %s15, 4
      %s25 = sphi 0, %s27
      %s28 = sphi 0, %s25
      %s29 = sphi 0, %s28
      %s45 = sphi 0, %s29
      %s49 = sphi 0, %s49
      %s51 = sphi 0, %s49
      %s52 = sphi 0, %s51
      %s66 = sphi 0, %s52
      %s70 = sphi 0, %s70
      %s72 = sphi 0, %s70
      %s73 = sphi 0, %s72
      %s87 = sphi 0, %s73
      %s91 = sphi 0, %s91
      %s93 = sphi 0, %s91
      %s94 = sphi 0, %s93
      %s108 = sphi 0, %s94
      %s112 = sphi 0, %s112
      %s114 = sphi 0, %s112
      %s115 = sphi 0, %s114
      %s129 = sphi 0, %s115
      %s135 = sphi 0, %s137
      %s138 = sphi 0, %s135
      %s139 = sphi 0, %s138
      %s155 = sphi 0, %s139
    $region4: #{tpu_custom_call.1} parent=1 // loop_header_branch
      %18 = sbr.rel (%p16) target = $region8
    $region5: #{tpu_custom_call.1} parent=1 // loop_body
      %s20 = ssub.s32 %s15, 1
      %s21 = ssub.s32 %s15, 2
      %s22 = sadd.s32 %s15, 1
      %s23 = ssub.s32 %s15, %s22
      %p24 = scmp.eq.s32.totalorder %s23, 0
      %s26 = sadd.s32 %s25, 1
      %s27 = scalar_select %p24, %s25, %s26
      %p30 = pneg %p24
      %p31 = scmp.eq.s32.totalorder %s15, 1
      %p32 = por %p30, %p31
      %p33 = scmp.ne.s32.totalorder %s25, %s28
      %p34 = scmp.eq.s32.totalorder %s15, 0
      %p35 = por %p33, %p34
      %p36 = scmp.ne.s32.totalorder %s25, %s28
      %p37 = scmp.eq.s32.totalorder %s20, 1
      %p38 = por %p36, %p37
      %p39 = scmp.ne.s32.totalorder %s28, %s29
      %p40 = scmp.eq.s32.totalorder %s20, 0
      %p41 = por %p39, %p40
      %p42 = scmp.ne.s32.totalorder %s28, %s29
      %p43 = scmp.eq.s32.totalorder %s21, 1
      %p44 = por %p42, %p43
      %p46 = scmp.ne.s32.totalorder %s29, %s45
      %p47 = scmp.eq.s32.totalorder %s21, 0
      %p48 = por %p46, %p47
      %s50 = sadd.s32 %s49, 1
      %p53 = scmp.eq.s32.totalorder %s15, 1
      %p54 = scmp.ne.s32.totalorder %s49, %s51
      %p55 = scmp.eq.s32.totalorder %s15, 0
      %p56 = por %p54, %p55
      %p57 = scmp.ne.s32.totalorder %s49, %s51
      %p58 = scmp.eq.s32.totalorder %s20, 1
      %p59 = por %p57, %p58
      %p60 = scmp.ne.s32.totalorder %s51, %s52
      %p61 = scmp.eq.s32.totalorder %s20, 0
      %p62 = por %p60, %p61
      %p63 = scmp.ne.s32.totalorder %s51, %s52
      %p64 = scmp.eq.s32.totalorder %s21, 1
      %p65 = por %p63, %p64
      %p67 = scmp.ne.s32.totalorder %s52, %s66
      %p68 = scmp.eq.s32.totalorder %s21, 0
      %p69 = por %p67, %p68
      %s71 = sadd.s32 %s70, 1
      %p74 = scmp.eq.s32.totalorder %s15, 1
      %p75 = scmp.ne.s32.totalorder %s70, %s72
      %p76 = scmp.eq.s32.totalorder %s15, 0
      %p77 = por %p75, %p76
      %p78 = scmp.ne.s32.totalorder %s70, %s72
      %p79 = scmp.eq.s32.totalorder %s20, 1
      %p80 = por %p78, %p79
      %p81 = scmp.ne.s32.totalorder %s72, %s73
      %p82 = scmp.eq.s32.totalorder %s20, 0
      %p83 = por %p81, %p82
      %p84 = scmp.ne.s32.totalorder %s72, %s73
      %p85 = scmp.eq.s32.totalorder %s21, 1
      %p86 = por %p84, %p85
      %p88 = scmp.ne.s32.totalorder %s73, %s87
      %p89 = scmp.eq.s32.totalorder %s21, 0
      %p90 = por %p88, %p89
      %s92 = sadd.s32 %s91, 1
      %p95 = scmp.eq.s32.totalorder %s15, 1
      %p96 = scmp.ne.s32.totalorder %s91, %s93
      %p97 = scmp.eq.s32.totalorder %s15, 0
      %p98 = por %p96, %p97
      %p99 = scmp.ne.s32.totalorder %s91, %s93
      %p100 = scmp.eq.s32.totalorder %s20, 1
      %p101 = por %p99, %p100
      %p102 = scmp.ne.s32.totalorder %s93, %s94
      %p103 = scmp.eq.s32.totalorder %s20, 0
      %p104 = por %p102, %p103
      %p105 = scmp.ne.s32.totalorder %s93, %s94
      %p106 = scmp.eq.s32.totalorder %s21, 1
      %p107 = por %p105, %p106
      %p109 = scmp.ne.s32.totalorder %s94, %s108
      %p110 = scmp.eq.s32.totalorder %s21, 0
      %p111 = por %p109, %p110
      %s113 = sadd.s32 %s112, 1
      %p116 = scmp.eq.s32.totalorder %s15, 1
      %p117 = scmp.ne.s32.totalorder %s112, %s114
      %p118 = scmp.eq.s32.totalorder %s15, 0
      %p119 = por %p117, %p118
      %p120 = scmp.ne.s32.totalorder %s112, %s114
      %p121 = scmp.eq.s32.totalorder %s20, 1
      %p122 = por %p120, %p121
      %p123 = scmp.ne.s32.totalorder %s114, %s115
      %p124 = scmp.eq.s32.totalorder %s20, 0
      %p125 = por %p123, %p124
      %p126 = scmp.ne.s32.totalorder %s114, %s115
      %p127 = scmp.eq.s32.totalorder %s21, 1
      %p128 = por %p126, %p127
      %p130 = scmp.ne.s32.totalorder %s115, %s129
      %p131 = scmp.eq.s32.totalorder %s21, 0
      %p132 = por %p130, %p131
      %s133 = ssub.s32 %s15, %s22
      %p134 = scmp.eq.s32.totalorder %s133, 0
      %s136 = sadd.s32 %s135, 1
      %s137 = scalar_select %p134, %s135, %s136
      %p140 = pneg %p134
      %p141 = scmp.eq.s32.totalorder %s15, 1
      %p142 = por %p140, %p141
      %p143 = scmp.ne.s32.totalorder %s135, %s138
      %p144 = scmp.eq.s32.totalorder %s15, 0
      %p145 = por %p143, %p144
      %p146 = scmp.ne.s32.totalorder %s135, %s138
      %p147 = scmp.eq.s32.totalorder %s20, 1
      %p148 = por %p146, %p147
      %p149 = scmp.ne.s32.totalorder %s138, %s139
      %p150 = scmp.eq.s32.totalorder %s20, 0
      %p151 = por %p149, %p150
      %p152 = scmp.ne.s32.totalorder %s138, %s139
      %p153 = scmp.eq.s32.totalorder %s21, 1
      %p154 = por %p152, %p153
      %p156 = scmp.ne.s32.totalorder %s139, %s155
      %p157 = scmp.eq.s32.totalorder %s21, 0
      %p158 = por %p156, %p157
      %p159 = scmp.le.s32.totalorder 1, %s15
      %p160 = scmp.lt.s32.totalorder %s15, 3
      %p161 = pnand %p159, %p160
      %p162 = pneg %p161
      // Predicated region
      $region9: #{tpu_custom_call.1} parent=5 // pred_check
        _
      $region10: #{tpu_custom_call.1} parent=5 // pred_check_branch
        %164 = sbr.rel (%p161) target = $region12
      $region11: #{tpu_custom_call.1} parent=5 // pred_region
        %s165 = ssub.s32 %s15, 1
        // Predicated region
        $region13: #{tpu_custom_call.1} parent=11 // pred_check
          %p166 = pneg %p62
        $region14: #{tpu_custom_call.1} parent=11 // pred_check_branch
          %168 = sbr.rel (%p166) target = $region16
        $region15: #{tpu_custom_call.1} parent=11 // pred_region
          _
        $region16: #{tpu_custom_call.1} parent=11 // pred_fallthru
          _
        // Predicated region
        $region17: #{tpu_custom_call.1} parent=11 // pred_check
          %p169 = pneg %p83
        $region18: #{tpu_custom_call.1} parent=11 // pred_check_branch
          %171 = sbr.rel (%p169) target = $region20
        $region19: #{tpu_custom_call.1} parent=11 // pred_region
          %s173 = ssub.s32 2304, 2304
          %174 = vsyncadd [#allocation4], %s173
          %s175 = sshll.u32 [#allocation3], 4
          %s176 = int_to_ptr.vmem [resolvable:$true] %s175
          %181 = dma.hbm_to_vmem [thread:$0]  %s2, 2304, %s176, [#allocation4], 256, 256, 16
        $region20: #{tpu_custom_call.1} parent=11 // pred_fallthru
          _
        // Predicated region
        $region21: #{tpu_custom_call.1} parent=11 // pred_check
          %p182 = pneg %p104
        $region22: #{tpu_custom_call.1} parent=11 // pred_check_branch
          %184 = sbr.rel (%p182) target = $region24
        $region23: #{tpu_custom_call.1} parent=11 // pred_region
          _
        $region24: #{tpu_custom_call.1} parent=11 // pred_fallthru
          _
        // Predicated region
        $region25: #{tpu_custom_call.1} parent=11 // pred_check
          %p185 = pneg %p125
        $region26: #{tpu_custom_call.1} parent=11 // pred_check_branch
          %187 = sbr.rel (%p185) target = $region28
        $region27: #{tpu_custom_call.1} parent=11 // pred_region
          _
        $region28: #{tpu_custom_call.1} parent=11 // pred_fallthru
          _
      $region12: #{tpu_custom_call.1} parent=5 // pred_fallthru
        _
      %p188 = scmp.lt.s32.totalorder %s15, 2
      // Predicated region
      $region29: #{tpu_custom_call.1} parent=5 // pred_check
        %p189 = pneg %p188
      $region30: #{tpu_custom_call.1} parent=5 // pred_check_branch
        %191 = sbr.rel (%p189) target = $region32
      $region31: #{tpu_custom_call.1} parent=5 // pred_region
        // Predicated region
        $region33: #{tpu_custom_call.1} parent=31 // pred_check
          %p192 = pneg %p35
        $region34: #{tpu_custom_call.1} parent=31 // pred_check_branch
          %194 = sbr.rel (%p192) target = $region36
        $region35: #{tpu_custom_call.1} parent=31 // pred_region
          %p195 = scmp.lt.s32.totalorder %s15, 1
          %s196 = scalar_select %p195, %s15, 1
          %s197 = smul.addr %s196, 2
          %s198 = smul.addr %s197, 4
          %s199 = scalar_lea.vmem %s0, %s198
        $region36: #{tpu_custom_call.1} parent=31 // pred_fallthru
          _
      $region32: #{tpu_custom_call.1} parent=5 // pred_fallthru
        _
      %p200 = scmp.le.s32.totalorder 1, %s15
      %p201 = scmp.lt.s32.totalorder %s15, 3
      %p202 = pnand %p200, %p201
      %p203 = pneg %p202
      // Predicated region
      $region37: #{tpu_custom_call.1} parent=5 // pred_check
        _
      $region38: #{tpu_custom_call.1} parent=5 // pred_check_branch
        %205 = sbr.rel (%p202) target = $region40
      $region39: #{tpu_custom_call.1} parent=5 // pred_region
        %s206 = ssub.s32 %s15, 1
        // Predicated region
        $region41: #{tpu_custom_call.1} parent=39 // pred_check
          %p207 = pneg %p83
        $region42: #{tpu_custom_call.1} parent=39 // pred_check_branch
          %209 = sbr.rel (%p207) target = $region44
        $region43: #{tpu_custom_call.1} parent=39 // pred_region
          %210 = dma.done [#allocation4], 2304
        $region44: #{tpu_custom_call.1} parent=39 // pred_fallthru
          _
        %p211 = scmp.lt.s32.totalorder %s20, 1
        %s212 = scalar_select %p211, %s20, 1
        %s213 = smul.addr %s212, 2
        %s214 = smul.addr %s213, 4
        %s215 = scalar_lea.vmem %s0, %s214
        %p216 = pneg %p41
        %p217 = pneg %p38
        %p218 = pneg %p62
        %p219 = pneg %p59
        %p220 = pneg %p83
        %p221 = pneg %p80
        %p222 = pneg %p104
        %p223 = pneg %p101
        %p224 = pneg %p125
        %p225 = pneg %p122
        %p226 = pneg %p151
        %p227 = pneg %p148
        %s228 = sand.u32 %s138, 1
        %s229 = scalar_lea.sflag [#allocation5], %s228
        %s230 = sand.u32 %s138, 1
        %s231 = smul.addr %s230, 8
        %s232 = scalar_lea.vmem [#allocation6], %s231
        %p233 = scmp.lt.s32.totalorder %s20, 1
        %s234 = scalar_select %p233, %s20, 1
        %s235 = smul.addr %s234, 2
        %s236 = smul.addr %s235, 4
        %s237 = scalar_lea.vmem %s0, %s236
        %239 = vst [vmem:[#allocation2] sm:$0xff] 0.0
        %240 = vst [vmem:[#allocation2 + $0x18] sm:$0xff] 0.0
        %v241 = vld [vmem:[%s1] sm:$0xf]
        %v242 = vld [vmem:[%s3] sm:$0xf]
        %v243 = vld [vmem:[%s4] sm:$0xff]
        %v244 = vld [vmem:[%s4 + $0x8] sm:$0xff]
        %v245 = vld [vmem:[%s4 + $0x10] sm:$0xff]
        %v246 = vld [vmem:[%s237] sm:$0xff]
        %248 = vset.pattern.permute.xlu0 0
        %249 = vperm.xlu0 %248, %v243
        %v250 = vpop.permute.xlu0 %249
        %v253 = vunpack.c.l.b16 %v246
        %v254 = vunpack.c.h.b16 %v246
        %v255 = vpack.c.b16 %v253, %v253
        %v256 = vpack.c.b16 %v254, %v254
        %vm257 = vcmask 64512
        %v259 = vsel %vm257, %v241, 0
        %vm261 = vcmask 1043456
        %v263 = vsel %vm261, %v255, 0
        %v266 = vsel %vm261, %v256, 0
        %268 = vmatprep.subr.bf16.mxu0 %v266
        %269 = vmatpush1.bf16.msra.mxu0 %v263
        %270 = vmatprep.subr.bf16.mxu0 0
        %271 = vmatpush1.bf16.msra.mxu0 0
        %272 = vmatprep.subr.bf16.mxu0 0
        %273 = vmatpush1.bf16.msra.mxu0 0
        %274 = vmatprep.subr.bf16.mxu0 0
        %275 = vmatpush1.bf16.msra.mxu0 0
        %276 = vmatprep.subr.bf16.mxu0 0
        %277 = vmatpush1.bf16.msra.mxu0 0
        %278 = vmatprep.subr.bf16.mxu0 0
        %279 = vmatpush1.bf16.msra.mxu0 0
        %280 = vmatprep.subr.bf16.mxu0 0
        %281 = vmatpush1.bf16.msra.mxu0 0
        %282 = vmatprep.subr.bf16.mxu0 0
        %283 = vmatpush1.bf16.msra.mxu0 0
        %284 = vmatprep.subr.bf16.mxu0 0
        %285 = vmatpush1.bf16.msra.mxu0 0
        %286 = vmatprep.subr.bf16.mxu0 0
        %287 = vmatpush1.bf16.msra.mxu0 0
        %288 = vmatprep.subr.bf16.mxu0 0
        %289 = vmatpush1.bf16.msra.mxu0 0
        %290 = vmatprep.subr.bf16.mxu0 0
        %291 = vmatpush1.bf16.msra.mxu0 0
        %292 = vmatprep.subr.bf16.mxu0 0
        %293 = vmatpush1.bf16.msra.mxu0 0
        %294 = vmatprep.subr.bf16.mxu0 0
        %295 = vmatpush1.bf16.msra.mxu0 0
        %296 = vmatprep.subr.bf16.mxu0 0
        %297 = vmatpush1.bf16.msra.mxu0 0
        %298 = vmatprep.subr.bf16.mxu0 0
        %299 = vmatpush1.bf16.msra.mxu0 0
        %300 = vmatprep.mubr.bf16.mxu0 0
        %301 = vmatmul.mubr.bf16.gmra.mrb[0].mxu0 %v259
        %v302 = vpop.f32.mrb[0].mxu0
        %v303 = vadd.f32 %v250, %v302
        %v304 = vpop.f32.mrb[0].mxu0
        %v305 = vadd.f32 %v250, %v304
        %v306 = vpop.f32.mrb[0].mxu0
        %v307 = vpop.f32.mrb[0].mxu0
        %308 = vdwg.mxu0
        %v309 = vmax.f32 %v303, 0.0
        %v310 = vmax.f32 %v305, 0.0
        %311 = vst [vmem:[#allocation2 + $0x8] sm:$0xff] %v309
        %312 = vst [vmem:[#allocation2 + $0x10] sm:$0xff] %v310
        %v313 = vld [vmem:[#allocation2] sm:$0xff]
        %v314 = vld [vmem:[#allocation2 + $0x8] sm:$0xff]
        %v315 = vld [vmem:[#allocation2 + $0x10] sm:$0xff]
        %v316 = vld [vmem:[#allocation3] sm:$0xff]
        %v317 = vld [vmem:[#allocation3 + $0x8] sm:$0xff]
        %320 = vrot.lane.b32.xlu0 %v316, 111
        %v321 = vpop.permute.xlu0 %320
        %322 = vrot.lane.b32.xlu0 %v317, 111
        %v323 = vpop.permute.xlu0 %322
        %vm324 = vcmask 908288
        %v325 = vsel %vm324, %v321, %v323
        %v329 = vmul.f32 %v313, %v321
        %v330 = vmul.f32 %v314, %v325
        %v331 = vmul.f32 %v315, %v323
        %s332 = scalar_lea.vmem [#allocation3], 16
        %v333 = vld [vmem:[%s332] sm:$0xff]
        %v334 = vld [vmem:[%s332 + $0x8] sm:$0xff]
        %337 = vrot.lane.b32.xlu0 %v333, 112
        %v338 = vpop.permute.xlu0 %337
        %339 = vrot.lane.b32.xlu0 %v334, 112
        %v340 = vpop.permute.xlu0 %339
        %vm341 = vcmask 916480
        %v342 = vsel %vm341, %v338, %v340
        %v346 = vmul.f32 %v313, %v338
        %v347 = vmul.f32 %v314, %v342
        %v348 = vmul.f32 %v315, %v340
        %352 = vrot.lane.b32.xlu0 %v346, 127
        %v353 = vpop.permute.xlu0 %352
        %354 = vrot.lane.b32.xlu0 %v347, 127
        %v355 = vpop.permute.xlu0 %354
        %356 = vrot.lane.b32.xlu0 %v348, 127
        %v357 = vpop.permute.xlu0 %356
        %vm358 = vcmask 1039360
        %v359 = vsel %vm358, %v353, %v355
        %v360 = vsel %vm358, %v355, %v357
        %v364 = vadd.f32 %v329, %v359
        %v365 = vadd.f32 %v330, %v360
        %v366 = vadd.f32 %v331, %v357
        %s367 = scalar_lea.vmem [#allocation3], 32
        %v368 = vld [vmem:[%s367] sm:$0xff]
        %v369 = vld [vmem:[%s367 + $0x8] sm:$0xff]
        %372 = vrot.lane.b32.xlu0 %v368, 113
        %v373 = vpop.permute.xlu0 %372
        %374 = vrot.lane.b32.xlu0 %v369, 113
        %v375 = vpop.permute.xlu0 %374
        %vm376 = vcmask 924672
        %v377 = vsel %vm376, %v373, %v375
        %v381 = vmul.f32 %v313, %v373
        %v382 = vmul.f32 %v314, %v377
        %v383 = vmul.f32 %v315, %v375
        %387 = vrot.lane.b32.xlu0 %v381, 126
        %v388 = vpop.permute.xlu0 %387
        %389 = vrot.lane.b32.xlu0 %v382, 126
        %v390 = vpop.permute.xlu0 %389
        %391 = vrot.lane.b32.xlu0 %v383, 126
        %v392 = vpop.permute.xlu0 %391
        %vm393 = vcmask 1031168
        %v394 = vsel %vm393, %v388, %v390
        %v395 = vsel %vm393, %v390, %v392
        %v399 = vadd.f32 %v364, %v394
        %v400 = vadd.f32 %v365, %v395
        %v401 = vadd.f32 %v366, %v392
        %s402 = scalar_lea.vmem [#allocation3], 48
        %v403 = vld [vmem:[%s402] sm:$0xff]
        %v404 = vld [vmem:[%s402 + $0x8] sm:$0xff]
        %407 = vrot.lane.b32.xlu0 %v403, 127
        %v408 = vpop.permute.xlu0 %407
        %409 = vrot.lane.b32.xlu0 %v404, 127
        %v410 = vpop.permute.xlu0 %409
        %v411 = vsel %vm358, %v408, %v410
        %v415 = vmul.f32 %v313, %v408
        %v416 = vmul.f32 %v314, %v411
        %v417 = vmul.f32 %v315, %v410
        %421 = vrot.lane.b32.xlu0 %v415, 112
        %v422 = vpop.permute.xlu0 %421
        %423 = vrot.lane.b32.xlu0 %v416, 112
        %v424 = vpop.permute.xlu0 %423
        %425 = vrot.lane.b32.xlu0 %v417, 112
        %v426 = vpop.permute.xlu0 %425
        %v427 = vsel %vm341, %v422, %v424
        %v428 = vsel %vm341, %v424, %v426
        %v432 = vadd.f32 %v399, %v427
        %v433 = vadd.f32 %v400, %v428
        %v434 = vadd.f32 %v401, %v426
        %s435 = scalar_lea.vmem [#allocation3], 64
        %v436 = vld [vmem:[%s435] sm:$0xff]
        %v437 = vld [vmem:[%s435 + $0x8] sm:$0xff]
        %v438 = vmul.f32 %v314, %v436
        %v439 = vmul.f32 %v315, %v437
        %442 = vrot.lane.b32.xlu0 %v438, 111
        %v443 = vpop.permute.xlu0 %442
        %444 = vrot.lane.b32.xlu0 %v439, 111
        %v445 = vpop.permute.xlu0 %444
        %v446 = vsel %vm324, %v443, %v445
        %v450 = vadd.f32 %v432, %v443
        %v451 = vadd.f32 %v433, %v446
        %v452 = vadd.f32 %v434, %v445
        %v453 = vld [vmem:[#allocation2 + $0x8] sm:$0xff]
        %v454 = vld [vmem:[#allocation2 + $0x10] sm:$0xff]
        %v455 = vld [vmem:[#allocation2 + $0x18] sm:$0xff]
        %s456 = scalar_lea.vmem [#allocation3], 80
        %v457 = vld [vmem:[%s456] sm:$0xff]
        %v458 = vld [vmem:[%s456 + $0x8] sm:$0xff]
        %461 = vrot.lane.b32.xlu0 %v457, 1
        %v462 = vpop.permute.xlu0 %461
        %463 = vrot.lane.b32.xlu0 %v458, 1
        %v464 = vpop.permute.xlu0 %463
        %vm465 = vcmask 7168
        %v466 = vsel %vm465, %v462, %v464
        %v470 = vmul.f32 %v453, %v462
        %v471 = vmul.f32 %v454, %v466
        %v472 = vmul.f32 %v455, %v464
        %476 = vrot.lane.b32.xlu0 %v470, 110
        %v477 = vpop.permute.xlu0 %476
        %478 = vrot.lane.b32.xlu0 %v471, 110
        %v479 = vpop.permute.xlu0 %478
        %480 = vrot.lane.b32.xlu0 %v472, 110
        %v481 = vpop.permute.xlu0 %480
        %vm482 = vcmask 900096
        %v483 = vsel %vm482, %v477, %v479
        %v484 = vsel %vm482, %v479, %v481
        %v488 = vadd.f32 %v450, %v477
        %v489 = vadd.f32 %v451, %v483
        %v490 = vadd.f32 %v452, %v484
        %s491 = scalar_lea.vmem [#allocation3], 96
        %v492 = vld [vmem:[%s491] sm:$0xff]
        %v493 = vld [vmem:[%s491 + $0x8] sm:$0xff]
        %496 = vrot.lane.b32.xlu0 %v492, 15
        %v497 = vpop.permute.xlu0 %496
        %498 = vrot.lane.b32.xlu0 %v493, 15
        %v499 = vpop.permute.xlu0 %498
        %vm500 = vcmask 121856
        %v501 = vsel %vm500, %v497, %v499
        %v505 = vmul.f32 %v453, %v497
        %v506 = vmul.f32 %v454, %v501
        %v507 = vmul.f32 %v455, %v499
        %511 = vrot.lane.b32.xlu0 %v505, 96
        %v512 = vpop.permute.xlu0 %511
        %513 = vrot.lane.b32.xlu0 %v506, 96
        %v514 = vpop.permute.xlu0 %513
        %515 = vrot.lane.b32.xlu0 %v507, 96
        %v516 = vpop.permute.xlu0 %515
        %vm517 = vcmask 785408
        %v518 = vsel %vm517, %v512, %v514
        %v519 = vsel %vm517, %v514, %v516
        %v523 = vadd.f32 %v488, %v512
        %v524 = vadd.f32 %v489, %v518
        %v525 = vadd.f32 %v490, %v519
        %s526 = scalar_lea.vmem [#allocation3], 112
        %v527 = vld [vmem:[%s526] sm:$0xff]
        %v528 = vld [vmem:[%s526 + $0x8] sm:$0xff]
        %531 = vrot.lane.b32.xlu0 %v527, 16
        %v532 = vpop.permute.xlu0 %531
        %533 = vrot.lane.b32.xlu0 %v528, 16
        %v534 = vpop.permute.xlu0 %533
        %vm535 = vcmask 130048
        %v536 = vsel %vm535, %v532, %v534
        %v540 = vmul.f32 %v453, %v532
        %v541 = vmul.f32 %v454, %v536
        %v542 = vmul.f32 %v455, %v534
        %546 = vrot.lane.b32.xlu0 %v540, 95
        %v547 = vpop.permute.xlu0 %546
        %548 = vrot.lane.b32.xlu0 %v541, 95
        %v549 = vpop.permute.xlu0 %548
        %550 = vrot.lane.b32.xlu0 %v542, 95
        %v551 = vpop.permute.xlu0 %550
        %vm552 = vcmask 777216
        %v553 = vsel %vm552, %v547, %v549
        %v554 = vsel %vm552, %v549, %v551
        %v558 = vadd.f32 %v523, %v547
        %v559 = vadd.f32 %v524, %v553
        %v560 = vadd.f32 %v525, %v554
        %s561 = scalar_lea.vmem [#allocation3], 128
        %v562 = vld [vmem:[%s561] sm:$0xff]
        %v563 = vld [vmem:[%s561 + $0x8] sm:$0xff]
        %566 = vrot.lane.b32.xlu0 %v562, 17
        %v567 = vpop.permute.xlu0 %566
        %568 = vrot.lane.b32.xlu0 %v563, 17
        %v569 = vpop.permute.xlu0 %568
        %vm570 = vcmask 138240
        %v571 = vsel %vm570, %v567, %v569
        %v575 = vmul.f32 %v453, %v567
        %v576 = vmul.f32 %v454, %v571
        %v577 = vmul.f32 %v455, %v569
        %581 = vrot.lane.b32.xlu0 %v575, 94
        %v582 = vpop.permute.xlu0 %581
        %583 = vrot.lane.b32.xlu0 %v576, 94
        %v584 = vpop.permute.xlu0 %583
        %585 = vrot.lane.b32.xlu0 %v577, 94
        %v586 = vpop.permute.xlu0 %585
        %vm587 = vcmask 769024
        %v588 = vsel %vm587, %v582, %v584
        %v589 = vsel %vm587, %v584, %v586
        %v593 = vadd.f32 %v558, %v582
        %v594 = vadd.f32 %v559, %v588
        %v595 = vadd.f32 %v560, %v589
        %597 = vset.pattern.permute.xlu0 0
        %598 = vperm.xlu0 %597, %v244
        %v599 = vpop.permute.xlu0 %598
        %v601 = vadd.f32 %v593, %v599
        %v602 = vadd.f32 %v594, %v599
        %v603 = vadd.f32 %v595, %v599
        %v604 = vmax.f32 %v601, 0.0
        %v605 = vmax.f32 %v602, 0.0
        %v606 = vmax.f32 %v603, 0.0
        %610 = vrot.lane.b32.xlu0 %v604, 17
        %v611 = vpop.permute.xlu0 %610
        %612 = vrot.lane.b32.xlu0 %v605, 17
        %v613 = vpop.permute.xlu0 %612
        %614 = vrot.lane.b32.xlu0 %v606, 17
        %v615 = vpop.permute.xlu0 %614
        %v616 = vsel %vm570, %v611, %v613
        %v617 = vsel %vm570, %v613, %v615
        %v620 = vpack.c.bf16 %v616, %v309
        %v621 = vpack.c.bf16 %v617, %v310
        %623 = vset.pattern.permute.xlu0 0
        %624 = vperm.xlu0 %623, %v245
        %v625 = vpop.permute.xlu0 %624
        %v628 = vsel %vm535, %v242, 0
        %630 = vmatprep.subr.bf16.mxu0 %v621
        %631 = vmatpush1.bf16.msra.mxu0 %v620
        %632 = vmatprep.subr.bf16.mxu0 0
        %633 = vmatpush1.bf16.msra.mxu0 0
        %634 = vmatprep.subr.bf16.mxu0 0
        %635 = vmatpush1.bf16.msra.mxu0 0
        %636 = vmatprep.subr.bf16.mxu0 0
        %637 = vmatpush1.bf16.msra.mxu0 0
        %638 = vmatprep.subr.bf16.mxu0 0
        %639 = vmatpush1.bf16.msra.mxu0 0
        %640 = vmatprep.subr.bf16.mxu0 0
        %641 = vmatpush1.bf16.msra.mxu0 0
        %642 = vmatprep.subr.bf16.mxu0 0
        %643 = vmatpush1.bf16.msra.mxu0 0
        %644 = vmatprep.subr.bf16.mxu0 0
        %645 = vmatpush1.bf16.msra.mxu0 0
        %646 = vmatprep.subr.bf16.mxu0 0
        %647 = vmatpush1.bf16.msra.mxu0 0
        %648 = vmatprep.subr.bf16.mxu0 0
        %649 = vmatpush1.bf16.msra.mxu0 0
        %650 = vmatprep.subr.bf16.mxu0 0
        %651 = vmatpush1.bf16.msra.mxu0 0
        %652 = vmatprep.subr.bf16.mxu0 0
        %653 = vmatpush1.bf16.msra.mxu0 0
        %654 = vmatprep.subr.bf16.mxu0 0
        %655 = vmatpush1.bf16.msra.mxu0 0
        %656 = vmatprep.subr.bf16.mxu0 0
        %657 = vmatpush1.bf16.msra.mxu0 0
        %658 = vmatprep.subr.bf16.mxu0 0
        %659 = vmatpush1.bf16.msra.mxu0 0
        %660 = vmatprep.subr.bf16.mxu0 0
        %661 = vmatpush1.bf16.msra.mxu0 0
        %662 = vmatprep.mubr.bf16.mxu0 0
        %663 = vmatmul.mubr.bf16.gmra.mrb[0].mxu0 %v628
        %v664 = vpop.f32.mrb[0].mxu0
        %v665 = vadd.f32 %v625, %v664
        %v666 = vpop.f32.mrb[0].mxu0
        %v667 = vadd.f32 %v625, %v666
        %v668 = vpop.f32.mrb[0].mxu0
        %v669 = vpop.f32.mrb[0].mxu0
        %670 = vdwg.mxu0
        %v671 = vmax.f32 %v665, 0.0
        %v672 = vmax.f32 %v667, 0.0
        %v673 = vpack.c.bf16 %v671, %v671
        %v674 = vpack.c.bf16 %v672, %v672
        %v677 = vunpack.c.l.b16 %v673
        %v678 = vunpack.c.l.b16 %v674
        %v679 = vpack.c.b16 %v678, %v677
        %681 = vst [vmem:[%s232] sm:$0xff] %v679
        %s682 = sand.u32 %s138, 1
        %s683 = scalar_lea.sflag [#allocation5], %s682
        %s684 = sand.u32 %s138, 1
        %s685 = smul.addr %s684, 8
        %s686 = scalar_lea.vmem [#allocation6], %s685
        // Predicated region
        $region45: #{tpu_custom_call.1} parent=39 // pred_check
          %p687 = pneg %p148
        $region46: #{tpu_custom_call.1} parent=39 // pred_check_branch
          %689 = sbr.rel (%p687) target = $region48
        $region47: #{tpu_custom_call.1} parent=39 // pred_region
          %s691 = ssub.s32 128, 128
          %692 = vsyncadd %s683, %s691
          %s693 = smul.addr %s20, 2
          %s694 = smul.addr %s693, 64
          %s695 = scalar_lea.hbm %s5, %s694
          %s697 = sshll.u32 %s686, 4
          %s698 = int_to_ptr.vmem [resolvable:$true] %s697
          %700 = dma.vmem_to_hbm [thread:$0]  %s698, 128, %s695, %s683
        $region48: #{tpu_custom_call.1} parent=39 // pred_fallthru
          _
      $region40: #{tpu_custom_call.1} parent=5 // pred_fallthru
        _
      %p701 = scmp.le.s32.totalorder 2, %s15
      // Predicated region
      $region49: #{tpu_custom_call.1} parent=5 // pred_check
        %p702 = pneg %p701
      $region50: #{tpu_custom_call.1} parent=5 // pred_check_branch
        %704 = sbr.rel (%p702) target = $region52
      $region51: #{tpu_custom_call.1} parent=5 // pred_region
        %s705 = ssub.s32 %s15, 2
        // Predicated region
        $region53: #{tpu_custom_call.1} parent=51 // pred_check
          %p706 = pneg %p154
        $region54: #{tpu_custom_call.1} parent=51 // pred_check_branch
          %708 = sbr.rel (%p706) target = $region56
        $region55: #{tpu_custom_call.1} parent=51 // pred_region
          %s709 = sand.u32 %s139, 1
          %s710 = scalar_lea.sflag [#allocation5], %s709
          %s711 = sand.u32 %s139, 1
          %s712 = smul.addr %s711, 8
          %s713 = scalar_lea.vmem [#allocation6], %s712
          %714 = dma.done %s710, 128
        $region56: #{tpu_custom_call.1} parent=51 // pred_fallthru
          _
      $region52: #{tpu_custom_call.1} parent=5 // pred_fallthru
        _
    $region6: #{tpu_custom_call.1} parent=1 // loop_footer
      %s19 = sadd.s32 1, %s15
    $region7: #{tpu_custom_call.1} parent=1 // loop_footer_branch
      %14 = sbr.rel target = $region3
    $region8: #{tpu_custom_call.1} parent=1 // loop_exit
      _
    %715 = vsyncpa [#allocation4], 1
    %s716 = scalar_lea.sflag [#allocation4], 1
    %717 = vsyncpa %s716, 1
    %718 = vsyncpa [#allocation5], 1
    %s719 = scalar_lea.sflag [#allocation5], 1
    %720 = vsyncpa %s719, 1

</llo_original>
